<compile_context>
chip_gen: v6e
topology: v6e:2x2x1
jax: 0.10.0
libtpu: 0.0.40
codegen_flags: <defaults>
</compile_context>

<pallas_src>
import functools

import jax
import jax.numpy as jnp
from jax.experimental import pallas as pl
from jax.experimental.pallas import tpu as pltpu

# ----------------------------- configuration --------------------------------
PATCH = 14           # fixed by TUMViTG_modified
EMBED_DIM = 128      # stands in for 1536 (lane-aligned)
NUM_HEADS = 4
MLP_HIDDEN = 128     # SwiGLU hidden dim (lane-aligned)
DEPTH = 2            # stands in for 40 blocks of ViT-g
LN_EPS = 1e-6
OUTPUT_MODE = "class"   # 'class' or 'class+mean'


def _round_up(x, m):
    return ((x + m - 1) // m) * m


def _vmem_limit_bytes():
    # Per-generation VMEM budget: ~3/4 of physical, capped at 100 MiB
    # (v5e/v6e -> 96-100 MiB, v7x -> 48 MiB of its 64 MiB).
    try:
        cap = int(pltpu.get_tpu_info().vmem_capacity_bytes)
        return min((cap * 3) // 4, 100 * 1024 * 1024)
    except Exception:
        return 64 * 1024 * 1024


VMEM_LIMIT = _vmem_limit_bytes()


# ------------------------------- kernels -------------------------------------
def _layernorm(x, w, b, eps=LN_EPS):
    mu = jnp.mean(x, axis=-1, keepdims=True)
    var = jnp.mean((x - mu) ** 2, axis=-1, keepdims=True)
    return (x - mu) * jax.lax.rsqrt(var + eps) * w + b


def patch_proj_kernel(p_ref, w_ref, b_ref, o_ref):
    # p_ref: (tm, K_pad) bf16   w_ref: (K_pad, D) bf16   b_ref: (1, D) f32
    o_ref[...] = (
        jnp.dot(p_ref[...], w_ref[...], preferred_element_type=jnp.float32)
        + b_ref[...]
    )


def block_kernel(
    x_ref,
    ln1w_ref, ln1b_ref,
    qkvw_ref, qkvb_ref,
    projw_ref, projb_ref,
    ls1_ref,
    ln2w_ref, ln2b_ref,
    w12_ref, b12_ref,
    w3_ref, b3_ref,
    ls2_ref,
    out_ref,
    *, num_heads, t_real,
):
    xb = x_ref[...]                      # (Bb, T, D) f32, T padded to mult of 8
    Bb, T, D = xb.shape
    dh = D // num_heads
    scale = dh ** -0.5
    # flatten batch group so every weight matmul sees M = Bb*T rows (MXU lever)
    x = xb.reshape(Bb * T, D)

    # ---- attention branch: LN -> QKV (bf16 operands, f32 accumulate) ----
    y = _layernorm(x, ln1w_ref[...], ln1b_ref[...])
    qkv = (
        jnp.dot(y.astype(jnp.bfloat16), qkvw_ref[...],
                preferred_element_type=jnp.float32)
        + qkvb_ref[...]
    )                                    # (Bb*T, 3D) f32

    # additive key mask, built once at (1, 1, T): padded keys (>= t_real) -> -1e30
    key_idx = jax.lax.broadcasted_iota(jnp.int32, (1, 1, T), 2)
    neg_bias = jnp.where(key_idx < t_real, 0.0, -1e30).astype(jnp.float32)

    # per-batch-element attention (static unroll; heads as a leading batch dim
    # for the einsums -- the only form Mosaic dot_general reliably lowers).
    attn_rows = []
    for b in range(Bb):
        qkv_b = qkv[b * T:(b + 1) * T]                                # (T, 3D)
        q = qkv_b[:, 0 * D:1 * D].reshape(T, num_heads, dh).transpose(1, 0, 2)
        k = qkv_b[:, 1 * D:2 * D].reshape(T, num_heads, dh).transpose(1, 0, 2)
        v = qkv_b[:, 2 * D:3 * D].reshape(T, num_heads, dh).transpose(1, 0, 2)
        s = jnp.einsum("hqd,hkd->hqk",
                       q.astype(jnp.bfloat16), k.astype(jnp.bfloat16),
                       preferred_element_type=jnp.float32) * scale    # (H,T,T) f32
        s = s + neg_bias                                              # broadcast
        s = s - jnp.max(s, axis=-1, keepdims=True)
        e = jnp.exp(s)
        # approx reciprocal -> EUP slot instead of a VALU divide
        p = e * pl.reciprocal(jnp.sum(e, axis=-1, keepdims=True), approx=True)
        o = jnp.einsum("hqk,hkd->hqd",
                       p.astype(jnp.bfloat16), v.astype(jnp.bfloat16),
                       preferred_element_type=jnp.float32)            # (H,T,dh)
        attn_rows.append(o.transpose(1, 0, 2).reshape(T, D))
    attn = attn_rows[0] if Bb == 1 else jnp.concatenate(attn_rows, axis=0)

    attn = (
        jnp.dot(attn.astype(jnp.bfloat16), projw_ref[...],
                preferred_element_type=jnp.float32)
        + projb_ref[...]
    )
    x = x + ls1_ref[...] * attn                              # LayerScale residual

    # ---- SwiGLU-fused MLP branch ----
    y2 = _layernorm(x, ln2w_ref[...], ln2b_ref[...])
    x12 = (
        jnp.dot(y2.astype(jnp.bfloat16), w12_ref[...],
                preferred_element_type=jnp.float32)
        + b12_ref[...]
    )                                                        # (Bb*T, 2*MH)
    mh = w3_ref.shape[0]
    x1 = x12[:, :mh]
    xg = x12[:, mh:]
    hidden = (x1 * jax.nn.sigmoid(x1)) * xg                  # SiLU(x1) * x2, f32
    mlp = (
        jnp.dot(hidden.astype(jnp.bfloat16), w3_ref[...],
                preferred_element_type=jnp.float32)
        + b3_ref[...]
    )
    out_ref[...] = (x + ls2_ref[...] * mlp).reshape(Bb, T, D)


def norm_head_kernel(x_ref, w_ref, b_ref, o_ref, *, t_real):
    # Fused final LayerNorm + output-head reduction for the WHOLE batch:
    # o[:, 0] = normed class token ; o[:, 1] = mean of normed patch tokens.
    x = x_ref[...]                                            # (B, T, D)
    xn = _layernorm(x, w_ref[...], b_ref[...])
    _, T, _ = xn.shape
    row = jax.lax.broadcasted_iota(jnp.int32, (1, T, 1), 1)
    pmask = jnp.logical_and(row >= 1, row < t_real).astype(xn.dtype)
    pmean = jnp.sum(xn * pmask, axis=1, keepdims=True) / float(t_real - 1)
    o_ref[:, 0:1, :] = xn[:, 0:1, :]
    o_ref[:, 1:2, :] = pmean


# ------------------------------ wrappers --------------------------------------
def run_patch_proj(patches, w, b, tile_m=512):
    M, K = patches.shape
    D = w.shape[1]
    K_pad = _round_up(K, 128)
    tm = min(tile_m, _round_up(M, 16))        # bf16 sublane tile is 16
    M_pad = _round_up(M, tm)
    patches = patches.astype(jnp.bfloat16)    # halve im2col DMA volume
    if K_pad != K or M_pad != M:
        patches = jnp.pad(patches, ((0, M_pad - M), (0, K_pad - K)))
    if K_pad != K:
        w = jnp.pad(w, ((0, K_pad - K), (0, 0)))
    out = pl.pallas_call(
        patch_proj_kernel,
        grid=(M_pad // tm,),
        in_specs=[
            pl.BlockSpec((tm, K_pad), lambda i: (i, 0)),
            pl.BlockSpec((K_pad, D), lambda i: (0, 0)),
            pl.BlockSpec((1, D), lambda i: (0, 0)),
        ],
        out_specs=pl.BlockSpec((tm, D), lambda i: (i, 0)),
        out_shape=jax.ShapeDtypeStruct((M_pad, D), jnp.float32),
        compiler_params=pltpu.CompilerParams(
            dimension_semantics=("parallel",),
            vmem_limit_bytes=VMEM_LIMIT,
        ),
    )(patches, w.astype(jnp.bfloat16), b)
    return out[:M]


def run_block(xseq, blk, num_heads, t_real, block_batch):
    B, T, D = xseq.shape
    assert B % block_batch == 0
    mh = blk["w3"].shape[0]

    def const_spec(shape):
        return pl.BlockSpec(shape, lambda b: tuple(0 for _ in shape))

    # Weight blocks have a constant index_map over the batch grid (kept resident
    # between steps).  At real scale they should be single-buffered / scratch-
    # loaded and K/N-tiled (see header TODO).
    in_specs = [
        pl.BlockSpec((block_batch, T, D), lambda b: (b, 0, 0)),
        const_spec((1, D)), const_spec((1, D)),              # ln1 w/b
        const_spec((D, 3 * D)), const_spec((1, 3 * D)),      # qkv w/b (pre-transposed, bf16)
        const_spec((D, D)), const_spec((1, D)),              # proj w/b
        const_spec((1, D)),                                  # ls1
        const_spec((1, D)), const_spec((1, D)),              # ln2 w/b
        const_spec((D, 2 * mh)), const_spec((1, 2 * mh)),    # w12/b12
        const_spec((mh, D)), const_spec((1, D)),              # w3/b3
        const_spec((1, D)),                                  # ls2
    ]
    return pl.pallas_call(
        functools.partial(block_kernel, num_heads=num_heads, t_real=t_real),
        grid=(B // block_batch,),
        in_specs=in_specs,
        out_specs=pl.BlockSpec((block_batch, T, D), lambda b: (b, 0, 0)),
        out_shape=jax.ShapeDtypeStruct((B, T, D), jnp.float32),
        compiler_params=pltpu.CompilerParams(
            dimension_semantics=("parallel",),
            vmem_limit_bytes=VMEM_LIMIT,
        ),
    )(
        xseq,
        blk["ln1_w"], blk["ln1_b"],
        blk["qkv_w"], blk["qkv_b"],
        blk["proj_w"], blk["proj_b"],
        blk["ls1"],
        blk["ln2_w"], blk["ln2_b"],
        blk["w12"], blk["b12"],
        blk["w3"], blk["b3"],
        blk["ls2"],
    )


def run_norm_head(xseq, w, b, t_real):
    B, T, D = xseq.shape
    return pl.pallas_call(
        functools.partial(norm_head_kernel, t_real=t_real),
        grid=(1,),
        in_specs=[
            pl.BlockSpec((B, T, D), lambda i: (0, 0, 0)),
            pl.BlockSpec((1, D), lambda i: (0, 0)),
            pl.BlockSpec((1, D), lambda i: (0, 0)),
        ],
        out_specs=pl.BlockSpec((B, 2, D), lambda i: (0, 0, 0)),
        out_shape=jax.ShapeDtypeStruct((B, 2, D), jnp.float32),
        compiler_params=pltpu.CompilerParams(
            dimension_semantics=("arbitrary",),
            vmem_limit_bytes=VMEM_LIMIT,
        ),
    )(xseq, w, b)


def tum_vitg_forward(x_nchw, params, output_mode=OUTPUT_MODE, block_batch=None):
    """Pallas implementation of TUMViTG_modified.forward (synthetic weights)."""
    B, C, H, W = x_nchw.shape
    gh, gw = H // PATCH, W // PATCH
    N = gh * gw
    D = params["cls_token"].shape[-1]
    T = N + 1
    T_pad = _round_up(T, 8)

    # choose how many batch elements share a grid step so the fused matmuls see
    # >= ~256 rows of M; cap the in-kernel attention unroll at 8.
    if block_batch is None:
        block_batch = max(1, min(B, pl.cdiv(256, T_pad), 8))
    B_pad = _round_up(B, block_batch)

    # ---- patch_embed: im2col (glue) + Pallas matmul (conv k=s=patch) ----
    patches = x_nchw.reshape(B, C, gh, PATCH, gw, PATCH)
    patches = patches.transpose(0, 2, 4, 1, 3, 5).reshape(B * N, C * PATCH * PATCH)
    tok = run_patch_proj(patches, params["patch_w"], params["patch_b"])
    tok = tok.reshape(B, N, D)

    # ---- cls token concat + pos embed add + batch/sublane padding (glue) ----
    cls = jnp.broadcast_to(params["cls_token"], (B, 1, D)).astype(jnp.float32)
    xseq = jnp.concatenate([cls, tok], axis=1) + params["pos_embed"]   # (B, T, D)
    xseq = jnp.pad(xseq, ((0, B_pad - B), (0, T_pad - T), (0, 0)))

    # ---- transformer blocks ----
    for blk in params["blocks"]:
        xseq = run_block(xseq, blk, NUM_HEADS, T, block_batch)

    # ---- fused final norm + output head (whole batch, one step) ----
    head = run_norm_head(xseq, params["norm_w"], params["norm_b"], T)[:B]
    if output_mode == "class":
        return head[:, 0]
    return jnp.concatenate([head[:, 0], head[:, 1]], axis=-1)


# --------------------------- pure-JAX reference -------------------------------
def reference_forward(x_nchw, params, output_mode=OUTPUT_MODE):
    B, C, H, W = x_nchw.shape
    gh, gw = H // PATCH, W // PATCH
    N = gh * gw
    D = params["cls_token"].shape[-1]
    patches = x_nchw.reshape(B, C, gh, PATCH, gw, PATCH)
    patches = patches.transpose(0, 2, 4, 1, 3, 5).reshape(B * N, C * PATCH * PATCH)
    tok = (patches @ params["patch_w"] + params["patch_b"]).reshape(B, N, D)
    cls = jnp.broadcast_to(params["cls_token"], (B, 1, D))
    x = jnp.concatenate([cls, tok], axis=1) + params["pos_embed"]

    def ln(v, w, b):
        mu = v.mean(-1, keepdims=True)
        var = ((v - mu) ** 2).mean(-1, keepdims=True)
        return (v - mu) * jax.lax.rsqrt(var + LN_EPS) * w + b

    dh = D // NUM_HEADS
    for blk in params["blocks"]:
        y = ln(x, blk["ln1_w"], blk["ln1_b"])
        qkv = y @ blk["qkv_w"] + blk["qkv_b"]
        q, k, v = qkv[..., :D], qkv[..., D:2 * D], qkv[..., 2 * D:]
        q = q.reshape(B, -1, NUM_HEADS, dh).transpose(0, 2, 1, 3)
        k = k.reshape(B, -1, NUM_HEADS, dh).transpose(0, 2, 1, 3)
        v = v.reshape(B, -1, NUM_HEADS, dh).transpose(0, 2, 1, 3)
        s = jnp.einsum("bhqd,bhkd->bhqk", q, k) * dh ** -0.5
        p = jax.nn.softmax(s, axis=-1)
        o = jnp.einsum("bhqk,bhkd->bhqd", p, v).transpose(0, 2, 1, 3).reshape(B, -1, D)
        o = o @ blk["proj_w"] + blk["proj_b"]
        x = x + blk["ls1"] * o
        y2 = ln(x, blk["ln2_w"], blk["ln2_b"])
        x12 = y2 @ blk["w12"] + blk["b12"]
        mh = blk["w3"].shape[0]
        hid = jax.nn.silu(x12[..., :mh]) * x12[..., mh:]
        m = hid @ blk["w3"] + blk["b3"]
        x = x + blk["ls2"] * m
    xn = ln(x, params["norm_w"], params["norm_b"])
    if output_mode == "class":
        return xn[:, 0]
    return jnp.concatenate([xn[:, 0], xn[:, 1:].mean(1)], axis=-1)


# ------------------------------ param init ------------------------------------
def init_params(key, img_size, in_chans=3):
    # All projection weights are stored pre-transposed as (in, out) AND cast to
    # bf16 once here (matmul operand dtype); biases / LN / layer-scales stay f32.
    # When loading real PyTorch weights, transpose + cast once at load time.
    gh, gw = img_size[0] // PATCH, img_size[1] // PATCH
    T = gh * gw + 1
    D, MH = EMBED_DIM, MLP_HIDDEN
    n_keys = 4 + 10 * DEPTH
    keys = jax.random.split(key, n_keys)
    ki = iter(keys)
    s = 0.02
    bf16 = jnp.bfloat16

    params = {
        # conv weight pre-flattened as (C*P*P, D), flatten order (c, ph, pw)
        # == nn.Conv2d.weight.reshape(D, -1).T
        "patch_w": (s * jax.random.normal(next(ki), (in_chans * PATCH * PATCH, D),
                                          jnp.float32)).astype(bf16),
        "patch_b": s * jax.random.normal(next(ki), (1, D), jnp.float32),
        "cls_token": s * jax.random.normal(next(ki), (1, 1, D), jnp.float32),
        # pos_embed already at the target resolution (bicubic resampling offline)
        "pos_embed": s * jax.random.normal(next(ki), (1, T, D), jnp.float32),
        "norm_w": jnp.ones((1, D), jnp.float32),
        "norm_b": jnp.zeros((1, D), jnp.float32),
        "blocks": [],
    }
    for _ in range(DEPTH):
        blk = {
            "ln1_w": jnp.ones((1, D), jnp.float32),
            "ln1_b": jnp.zeros((1, D), jnp.float32),
            "qkv_w": (s * jax.random.normal(next(ki), (D, 3 * D), jnp.float32)).astype(bf16),
            "qkv_b": s * jax.random.normal(next(ki), (1, 3 * D), jnp.float32),
            "proj_w": (s * jax.random.normal(next(ki), (D, D), jnp.float32)).astype(bf16),
            "proj_b": s * jax.random.normal(next(ki), (1, D), jnp.float32),
            "ls1": 1e-5 + s * jax.random.normal(next(ki), (1, D), jnp.float32),
            "ln2_w": jnp.ones((1, D), jnp.float32),
            "ln2_b": jnp.zeros((1, D), jnp.float32),
            "w12": (s * jax.random.normal(next(ki), (D, 2 * MH), jnp.float32)).astype(bf16),
            "b12": s * jax.random.normal(next(ki), (1, 2 * MH), jnp.float32),
            "w3": (s * jax.random.normal(next(ki), (MH, D), jnp.float32)).astype(bf16),
            "b3": s * jax.random.normal(next(ki), (1, D), jnp.float32),
            "ls2": 1e-5 + s * jax.random.normal(next(ki), (1, D), jnp.float32),
        }
        params["blocks"].append(blk)
    return params


# --------------------------------- main ----------------------------------------
if __name__ == "__main__":
    key = jax.random.PRNGKey(0)
    kx, kp = jax.random.split(key)

    # small shapes consistent with the module: img divisible by patch_size=14
    B, C = 2, 3
    img_size = (28, 28)          # -> 2x2 patch grid, T = 5 tokens (padded to 8)
    x = jax.random.normal(kx, (B, C, img_size[0], img_size[1]), jnp.float32)
    params = init_params(kp, img_size, in_chans=C)

    for mode in ("class", "class+mean"):
        out = tum_vitg_forward(x, params, output_mode=mode)
        out = jax.block_until_ready(out)
        ref = reference_forward(x, params, output_mode=mode)
        assert out.shape == ref.shape, (mode, out.shape, ref.shape)
        assert bool(jnp.all(jnp.isfinite(out))), mode
        # reference matmuls run in f32 while the kernel uses bf16 operands with
        # f32 accumulation -> loosened tolerance vs the f32-only version.
        err = float(jnp.max(jnp.abs(out - ref)))
        assert bool(jnp.allclose(out, ref, rtol=3e-2, atol=3e-2)), (mode, err)

    print("KERNEL_OK")
</pallas_src>

<mosaic_0001>
module attributes {stable_mosaic.version = 11 : i64} {
  func.func @patch_proj_kernel(%arg0: i32, %arg1: memref<16x640xbf16, #tpu.memory_space<vmem>>, %arg2: memref<640x128xbf16, #tpu.memory_space<vmem>>, %arg3: memref<1x128xf32, #tpu.memory_space<vmem>>, %arg4: memref<16x128xf32, #tpu.memory_space<vmem>>) attributes {dimension_semantics = [#tpu.dimension_semantics<parallel>], iteration_bounds = array<i64: 1>, scalar_prefetch = 0 : i64, scratch_operands = 0 : i64, tpu.core_type = #tpu.core_type<tc>, window_params = [{transform_indices = @transform_0, window_bounds = array<i64: 16, 640>}, {pipeline_mode = #tpu.pipeline_mode<synchronous>, transform_indices = @transform_1, window_bounds = array<i64: 640, 128>}, {pipeline_mode = #tpu.pipeline_mode<synchronous>, transform_indices = @transform_2, window_bounds = array<i64: 1, 128>}, {transform_indices = @transform_3, window_bounds = array<i64: 16, 128>}]} {
    %c0 = arith.constant 0 : index
    %c0_0 = arith.constant 0 : index
    %0 = vector.load %arg1[%c0, %c0_0] : memref<16x640xbf16, #tpu.memory_space<vmem>>, vector<16x640xbf16>
    %c0_1 = arith.constant 0 : index
    %c0_2 = arith.constant 0 : index
    %1 = vector.load %arg2[%c0_1, %c0_2] : memref<640x128xbf16, #tpu.memory_space<vmem>>, vector<640x128xbf16>
    %cst = arith.constant dense<0.000000e+00> : vector<16x128xf32>
    %2 = tpu.matmul %0, %1, %cst {dimension_numbers = #tpu.dot_dimension_numbers<[1], [0], [0], [1], [0, 0, 1, 1], [], []>} : vector<16x640xbf16>, vector<640x128xbf16>, vector<16x128xf32> -> vector<16x128xf32>
    %c0_3 = arith.constant 0 : index
    %c0_4 = arith.constant 0 : index
    %3 = vector.load %arg3[%c0_3, %c0_4] : memref<1x128xf32, #tpu.memory_space<vmem>>, vector<1x128xf32>
    %4 = vector.broadcast %3 : vector<1x128xf32> to vector<16x128xf32>
    %5 = arith.addf %2, %4 : vector<16x128xf32>
    %c0_5 = arith.constant 0 : index
    %c0_6 = arith.constant 0 : index
    %6 = vector.load %arg4[%c0_5, %c0_6] : memref<16x128xf32, #tpu.memory_space<vmem>>, vector<16x128xf32>
    tpu.vector_store %arg4[%c0_5, %c0_6], %5 {strides = array<i32>} : memref<16x128xf32, #tpu.memory_space<vmem>>, vector<16x128xf32>,
    return
  }
  func.func @transform_0(%arg0: i32) -> (i32, i32) {
    %c0_i32 = arith.constant 0 : i32
    %c0_i32_0 = arith.constant 0 : i32
    return %arg0, %c0_i32 : i32, i32
  }
  func.func @transform_1(%arg0: i32) -> (i32, i32) {
    %c0_i32 = arith.constant 0 : i32
    %c0_i32_0 = arith.constant 0 : i32
    %c0_i32_1 = arith.constant 0 : i32
    return %c0_i32, %c0_i32_0 : i32, i32
  }
  func.func @transform_2(%arg0: i32) -> (i32, i32) {
    %c0_i32 = arith.constant 0 : i32
    %c0_i32_0 = arith.constant 0 : i32
    %c0_i32_1 = arith.constant 0 : i32
    return %c0_i32, %c0_i32_0 : i32, i32
  }
  func.func @transform_3(%arg0: i32) -> (i32, i32) {
    %c0_i32 = arith.constant 0 : i32
    %c0_i32_0 = arith.constant 0 : i32
    return %arg0, %c0_i32 : i32, i32
  }
}

</mosaic_0001>

<llo_original>
// kernel: tpu_custom_call.1
$region0: #{tpu_custom_call.1}
  #allocation0 [shape = 'u32[]', space=smem, size = 0x4, offset = 0x4, fixed_abs, tag = 'smem constant byte address 0x4 - core index']
  #allocation1 [shape = 'u32[144,128]{1,0:T(1,128)}', space=vmem, size = 0x12000, scoped, tag = 'internal scratch']
  %s0 = inlined_call_operand.hbm [shape: bf16[16,640], index: 0, kind: input, shape index: {}]
  %s1 = inlined_call_operand.hbm [shape: bf16[640,128], index: 1, kind: input, shape index: {}]
  %s2 = inlined_call_operand.vmem [shape: f32[1,128], index: 2, kind: input, shape index: {}]
  %s3 = inlined_call_operand.hbm [shape: f32[16,128], index: 3, kind: output, shape index: {}]
  %s4 = sld [smem:[#allocation0]]
  $region30: #{tpu_custom_call.1} parent=0
    _
  %s6 = ssub.s32 1, %s4
  %s7 = scalar_select 0, %s6, %s4
  $region1: #{tpu_custom_call.1} parent=0
    #allocation2 [shape = 'u8[20480]{0}', space=vmem, size = 0x5000, scoped, tag = 'input window, operand 0, single buffered']
    #allocation3 [shape = 's32[1]{0}', space=sflag, size = 0x4, scoped, tag = 'scoped memory for tpu_custom_call.1']
    #allocation4 [shape = 's32[1]{0}', space=sflag, size = 0x4, scoped, tag = 'scoped memory for tpu_custom_call.1']
    #allocation5 [shape = 'u8[163840]{0}', space=vmem, size = 0x28000, scoped, tag = 'input window, operand 1, single buffered']
    #allocation6 [shape = 's32[1]{0}', space=sflag, size = 0x4, scoped, tag = 'scoped memory for tpu_custom_call.1']
    #allocation7 [shape = 'u8[8192]{0}', space=vmem, size = 0x2000, scoped, tag = 'output window, operand 0, single buffered']
    %8 = vsyncpa [#allocation3], 0
    %9 = vsyncpa [#allocation6], 0
    %10 = vsyncpa [#allocation4], 0
    // Predicated region
    $region2: #{tpu_custom_call.1} parent=1 // pred_check
      _
    $region3: #{tpu_custom_call.1} parent=1 // pred_check_branch
      %12 = sbr.rel (0) target = $region5
    $region4: #{tpu_custom_call.1} parent=1 // pred_region
      %s14 = ssub.s32 640, 640
      %15 = vsyncadd [#allocation3], %s14
      %s16 = sshll.u32 [#allocation2], 4
      %s17 = int_to_ptr.vmem [resolvable:$true] %s16
      %22 = dma.hbm_to_vmem [thread:$0]  %s0, 640, %s17, [#allocation3], 320, 320, 20
    $region5: #{tpu_custom_call.1} parent=1 // pred_fallthru
      _
    // Predicated region
    $region6: #{tpu_custom_call.1} parent=1 // pred_check
      _
    $region7: #{tpu_custom_call.1} parent=1 // pred_check_branch
      %24 = sbr.rel (0) target = $region9
    $region8: #{tpu_custom_call.1} parent=1 // pred_region
      %s26 = ssub.s32 5120, 5120
      %27 = vsyncadd [#allocation6], %s26
      %s28 = sshll.u32 [#allocation5], 4
      %s29 = int_to_ptr.vmem [resolvable:$true] %s28
      %34 = dma.hbm_to_vmem [thread:$0]  %s1, 5120, %s29, [#allocation6], 64, 64, 4
    $region9: #{tpu_custom_call.1} parent=1 // pred_fallthru
      _
    // Predicated region
    $region10: #{tpu_custom_call.1} parent=1 // pred_check
      _
    $region11: #{tpu_custom_call.1} parent=1 // pred_check_branch
      %36 = sbr.rel (0) target = $region13
    $region12: #{tpu_custom_call.1} parent=1 // pred_region
      _
    $region13: #{tpu_custom_call.1} parent=1 // pred_fallthru
      _
    // Predicated region
    $region14: #{tpu_custom_call.1} parent=1 // pred_check
      _
    $region15: #{tpu_custom_call.1} parent=1 // pred_check_branch
      %38 = sbr.rel (0) target = $region17
    $region16: #{tpu_custom_call.1} parent=1 // pred_region
      %39 = dma.done [#allocation3], 640
    $region17: #{tpu_custom_call.1} parent=1 // pred_fallthru
      _
    // Predicated region
    $region18: #{tpu_custom_call.1} parent=1 // pred_check
      _
    $region19: #{tpu_custom_call.1} parent=1 // pred_check_branch
      %41 = sbr.rel (0) target = $region21
    $region20: #{tpu_custom_call.1} parent=1 // pred_region
      %42 = dma.done [#allocation6], 5120
    $region21: #{tpu_custom_call.1} parent=1 // pred_fallthru
      _
    %v44 = vld [vmem:[#allocation2] sm:$0xff]
    %v45 = vld [vmem:[#allocation2 + $0x8] sm:$0xff]
    %v46 = vld [vmem:[#allocation2 + $0x10] sm:$0xf]
    %v47 = vld [vmem:[#allocation2 + $0x14] sm:$0xff]
    %v48 = vld [vmem:[#allocation2 + $0x1c] sm:$0xff]
    %v49 = vld [vmem:[#allocation2 + $0x24] sm:$0xf]
    %v50 = vld [vmem:[#allocation5] sm:$0xf]
    %v51 = vld [vmem:[#allocation5 + $0x4] sm:$0xf]
    %v52 = vld [vmem:[#allocation5 + $0x8] sm:$0xf]
    %v53 = vld [vmem:[#allocation5 + $0xc] sm:$0xf]
    %v54 = vld [vmem:[#allocation5 + $0x10] sm:$0xf]
    %v55 = vld [vmem:[#allocation5 + $0x14] sm:$0xf]
    %v56 = vld [vmem:[#allocation5 + $0x18] sm:$0xf]
    %v57 = vld [vmem:[#allocation5 + $0x1c] sm:$0xf]
    %v58 = vld [vmem:[#allocation5 + $0x20] sm:$0xf]
    %v59 = vld [vmem:[#allocation5 + $0x24] sm:$0xf]
    %v60 = vld [vmem:[#allocation5 + $0x28] sm:$0xf]
    %v61 = vld [vmem:[#allocation5 + $0x2c] sm:$0xf]
    %v62 = vld [vmem:[#allocation5 + $0x30] sm:$0xf]
    %v63 = vld [vmem:[#allocation5 + $0x34] sm:$0xf]
    %v64 = vld [vmem:[#allocation5 + $0x38] sm:$0xf]
    %v65 = vld [vmem:[#allocation5 + $0x3c] sm:$0xf]
    %v66 = vld [vmem:[#allocation5 + $0x40] sm:$0xf]
    %v67 = vld [vmem:[#allocation5 + $0x44] sm:$0xf]
    %v68 = vld [vmem:[#allocation5 + $0x48] sm:$0xf]
    %v69 = vld [vmem:[#allocation5 + $0x4c] sm:$0xf]
    %v70 = vld [vmem:[#allocation5 + $0x50] sm:$0xf]
    %v71 = vld [vmem:[#allocation5 + $0x54] sm:$0xf]
    %v72 = vld [vmem:[#allocation5 + $0x58] sm:$0xf]
    %v73 = vld [vmem:[#allocation5 + $0x5c] sm:$0xf]
    %v74 = vld [vmem:[#allocation5 + $0x60] sm:$0xf]
    %v75 = vld [vmem:[#allocation5 + $0x64] sm:$0xf]
    %v76 = vld [vmem:[#allocation5 + $0x68] sm:$0xf]
    %v77 = vld [vmem:[#allocation5 + $0x6c] sm:$0xf]
    %v78 = vld [vmem:[#allocation5 + $0x70] sm:$0xf]
    %v79 = vld [vmem:[#allocation5 + $0x74] sm:$0xf]
    %v80 = vld [vmem:[#allocation5 + $0x78] sm:$0xf]
    %v81 = vld [vmem:[#allocation5 + $0x7c] sm:$0xf]
    %v82 = vld [vmem:[#allocation5 + $0x80] sm:$0xf]
    %v83 = vld [vmem:[#allocation5 + $0x84] sm:$0xf]
    %v84 = vld [vmem:[#allocation5 + $0x88] sm:$0xf]
    %v85 = vld [vmem:[#allocation5 + $0x8c] sm:$0xf]
    %v86 = vld [vmem:[#allocation5 + $0x90] sm:$0xf]
    %v87 = vld [vmem:[#allocation5 + $0x94] sm:$0xf]
    %v88 = vld [vmem:[#allocation5 + $0x98] sm:$0xf]
    %v89 = vld [vmem:[#allocation5 + $0x9c] sm:$0xf]
    %v90 = vld [vmem:[#allocation5 + $0xa0] sm:$0xf]
    %v91 = vld [vmem:[#allocation5 + $0xa4] sm:$0xf]
    %v92 = vld [vmem:[#allocation5 + $0xa8] sm:$0xf]
    %v93 = vld [vmem:[#allocation5 + $0xac] sm:$0xf]
    %v94 = vld [vmem:[#allocation5 + $0xb0] sm:$0xf]
    %v95 = vld [vmem:[#allocation5 + $0xb4] sm:$0xf]
    %v96 = vld [vmem:[#allocation5 + $0xb8] sm:$0xf]
    %v97 = vld [vmem:[#allocation5 + $0xbc] sm:$0xf]
    %v98 = vld [vmem:[#allocation5 + $0xc0] sm:$0xf]
    %v99 = vld [vmem:[#allocation5 + $0xc4] sm:$0xf]
    %v100 = vld [vmem:[#allocation5 + $0xc8] sm:$0xf]
    %v101 = vld [vmem:[#allocation5 + $0xcc] sm:$0xf]
    %v102 = vld [vmem:[#allocation5 + $0xd0] sm:$0xf]
    %v103 = vld [vmem:[#allocation5 + $0xd4] sm:$0xf]
    %v104 = vld [vmem:[#allocation5 + $0xd8] sm:$0xf]
    %v105 = vld [vmem:[#allocation5 + $0xdc] sm:$0xf]
    %v106 = vld [vmem:[#allocation5 + $0xe0] sm:$0xf]
    %v107 = vld [vmem:[#allocation5 + $0xe4] sm:$0xf]
    %v108 = vld [vmem:[#allocation5 + $0xe8] sm:$0xf]
    %v109 = vld [vmem:[#allocation5 + $0xec] sm:$0xf]
    %v110 = vld [vmem:[#allocation5 + $0xf0] sm:$0xf]
    %v111 = vld [vmem:[#allocation5 + $0xf4] sm:$0xf]
    %v112 = vld [vmem:[#allocation5 + $0xf8] sm:$0xf]
    %v113 = vld [vmem:[#allocation5 + $0xfc] sm:$0xf]
    %v114 = vld [vmem:[#allocation5 + $0x100] sm:$0xf]
    %v115 = vld [vmem:[#allocation5 + $0x104] sm:$0xf]
    %v116 = vld [vmem:[#allocation5 + $0x108] sm:$0xf]
    %v117 = vld [vmem:[#allocation5 + $0x10c] sm:$0xf]
    %v118 = vld [vmem:[#allocation5 + $0x110] sm:$0xf]
    %v119 = vld [vmem:[#allocation5 + $0x114] sm:$0xf]
    %v120 = vld [vmem:[#allocation5 + $0x118] sm:$0xf]
    %v121 = vld [vmem:[#allocation5 + $0x11c] sm:$0xf]
    %v122 = vld [vmem:[#allocation5 + $0x120] sm:$0xf]
    %v123 = vld [vmem:[#allocation5 + $0x124] sm:$0xf]
    %v124 = vld [vmem:[#allocation5 + $0x128] sm:$0xf]
    %v125 = vld [vmem:[#allocation5 + $0x12c] sm:$0xf]
    %v126 = vld [vmem:[#allocation5 + $0x130] sm:$0xf]
    %v127 = vld [vmem:[#allocation5 + $0x134] sm:$0xf]
    %v128 = vld [vmem:[#allocation5 + $0x138] sm:$0xf]
    %v129 = vld [vmem:[#allocation5 + $0x13c] sm:$0xf]
    %v130 = vld [vmem:[%s2] sm:$0x1]
    %v132 = vlaneseq
    %v133 = vshrl.u32 %v132, 7
    %v134 = vsub.s32 0, %v133
    %v135 = vrot.slane %v130, %v134
    %v143 = vunpack.c.l.b16 %v44
    %v144 = vunpack.c.h.b16 %v44
    %v145 = vunpack.c.l.b16 %v45
    %v146 = vunpack.c.h.b16 %v45
    %v147 = vunpack.c.l.b16 %v46
    %v148 = vunpack.c.l.b16 %v47
    %v149 = vunpack.c.h.b16 %v47
    %v150 = vunpack.c.l.b16 %v48
    %v151 = vunpack.c.h.b16 %v48
    %v152 = vunpack.c.l.b16 %v49
    %v153 = vpack.c.b16 %v148, %v143
    %v154 = vpack.c.b16 %v149, %v144
    %v155 = vpack.c.b16 %v150, %v145
    %v156 = vpack.c.b16 %v151, %v146
    %v157 = vpack.c.b16 %v152, %v147
    %v243 = vunpack.c.l.b16 %v50
    %v244 = vunpack.c.l.b16 %v51
    %v245 = vunpack.c.l.b16 %v52
    %v246 = vunpack.c.l.b16 %v53
    %v247 = vunpack.c.l.b16 %v54
    %v248 = vunpack.c.l.b16 %v55
    %v249 = vunpack.c.l.b16 %v56
    %v250 = vunpack.c.l.b16 %v57
    %v251 = vunpack.c.l.b16 %v58
    %v252 = vunpack.c.l.b16 %v59
    %v253 = vunpack.c.l.b16 %v60
    %v254 = vunpack.c.l.b16 %v61
    %v255 = vunpack.c.l.b16 %v62
    %v256 = vunpack.c.l.b16 %v63
    %v257 = vunpack.c.l.b16 %v64
    %v258 = vunpack.c.l.b16 %v65
    %v259 = vunpack.c.l.b16 %v66
    %v260 = vunpack.c.l.b16 %v67
    %v261 = vunpack.c.l.b16 %v68
    %v262 = vunpack.c.l.b16 %v69
    %v263 = vunpack.c.l.b16 %v70
    %v264 = vunpack.c.l.b16 %v71
    %v265 = vunpack.c.l.b16 %v72
    %v266 = vunpack.c.l.b16 %v73
    %v267 = vunpack.c.l.b16 %v74
    %v268 = vunpack.c.l.b16 %v75
    %v269 = vunpack.c.l.b16 %v76
    %v270 = vunpack.c.l.b16 %v77
    %v271 = vunpack.c.l.b16 %v78
    %v272 = vunpack.c.l.b16 %v79
    %v273 = vunpack.c.l.b16 %v80
    %v274 = vunpack.c.l.b16 %v81
    %v275 = vunpack.c.l.b16 %v82
    %v276 = vunpack.c.l.b16 %v83
    %v277 = vunpack.c.l.b16 %v84
    %v278 = vunpack.c.l.b16 %v85
    %v279 = vunpack.c.l.b16 %v86
    %v280 = vunpack.c.l.b16 %v87
    %v281 = vunpack.c.l.b16 %v88
    %v282 = vunpack.c.l.b16 %v89
    %v283 = vunpack.c.l.b16 %v90
    %v284 = vunpack.c.l.b16 %v91
    %v285 = vunpack.c.l.b16 %v92
    %v286 = vunpack.c.l.b16 %v93
    %v287 = vunpack.c.l.b16 %v94
    %v288 = vunpack.c.l.b16 %v95
    %v289 = vunpack.c.l.b16 %v96
    %v290 = vunpack.c.l.b16 %v97
    %v291 = vunpack.c.l.b16 %v98
    %v292 = vunpack.c.l.b16 %v99
    %v293 = vunpack.c.l.b16 %v100
    %v294 = vunpack.c.l.b16 %v101
    %v295 = vunpack.c.l.b16 %v102
    %v296 = vunpack.c.l.b16 %v103
    %v297 = vunpack.c.l.b16 %v104
    %v298 = vunpack.c.l.b16 %v105
    %v299 = vunpack.c.l.b16 %v106
    %v300 = vunpack.c.l.b16 %v107
    %v301 = vunpack.c.l.b16 %v108
    %v302 = vunpack.c.l.b16 %v109
    %v303 = vunpack.c.l.b16 %v110
    %v304 = vunpack.c.l.b16 %v111
    %v305 = vunpack.c.l.b16 %v112
    %v306 = vunpack.c.l.b16 %v113
    %v307 = vunpack.c.l.b16 %v114
    %v308 = vunpack.c.l.b16 %v115
    %v309 = vunpack.c.l.b16 %v116
    %v310 = vunpack.c.l.b16 %v117
    %v311 = vunpack.c.l.b16 %v118
    %v312 = vunpack.c.l.b16 %v119
    %v313 = vunpack.c.l.b16 %v120
    %v314 = vunpack.c.l.b16 %v121
    %v315 = vunpack.c.l.b16 %v122
    %v316 = vunpack.c.l.b16 %v123
    %v317 = vunpack.c.l.b16 %v124
    %v318 = vunpack.c.l.b16 %v125
    %v319 = vunpack.c.l.b16 %v126
    %v320 = vunpack.c.l.b16 %v127
    %v321 = vunpack.c.l.b16 %v128
    %v322 = vunpack.c.l.b16 %v129
    %v323 = vpack.c.b16 %v244, %v243
    %v324 = vpack.c.b16 %v246, %v245
    %v325 = vpack.c.b16 %v248, %v247
    %v326 = vpack.c.b16 %v250, %v249
    %v327 = vpack.c.b16 %v252, %v251
    %v328 = vpack.c.b16 %v254, %v253
    %v329 = vpack.c.b16 %v256, %v255
    %v330 = vpack.c.b16 %v258, %v257
    %v331 = vpack.c.b16 %v260, %v259
    %v332 = vpack.c.b16 %v262, %v261
    %v333 = vpack.c.b16 %v264, %v263
    %v334 = vpack.c.b16 %v266, %v265
    %v335 = vpack.c.b16 %v268, %v267
    %v336 = vpack.c.b16 %v270, %v269
    %v337 = vpack.c.b16 %v272, %v271
    %v338 = vpack.c.b16 %v274, %v273
    %v339 = vpack.c.b16 %v276, %v275
    %v340 = vpack.c.b16 %v278, %v277
    %v341 = vpack.c.b16 %v280, %v279
    %v342 = vpack.c.b16 %v282, %v281
    %v343 = vpack.c.b16 %v284, %v283
    %v344 = vpack.c.b16 %v286, %v285
    %v345 = vpack.c.b16 %v288, %v287
    %v346 = vpack.c.b16 %v290, %v289
    %v347 = vpack.c.b16 %v292, %v291
    %v348 = vpack.c.b16 %v294, %v293
    %v349 = vpack.c.b16 %v296, %v295
    %v350 = vpack.c.b16 %v298, %v297
    %v351 = vpack.c.b16 %v300, %v299
    %v352 = vpack.c.b16 %v302, %v301
    %v353 = vpack.c.b16 %v304, %v303
    %v354 = vpack.c.b16 %v306, %v305
    %v355 = vpack.c.b16 %v308, %v307
    %v356 = vpack.c.b16 %v310, %v309
    %v357 = vpack.c.b16 %v312, %v311
    %v358 = vpack.c.b16 %v314, %v313
    %v359 = vpack.c.b16 %v316, %v315
    %v360 = vpack.c.b16 %v318, %v317
    %v361 = vpack.c.b16 %v320, %v319
    %v362 = vpack.c.b16 %v322, %v321
    %403 = vmatprep.subr.bf16.mxu0 0
    %404 = vmatpush1.bf16.msra.mxu0 %v330
    %405 = vmatprep.subr.bf16.mxu0 0
    %406 = vmatpush1.bf16.msra.mxu0 %v329
    %407 = vmatprep.subr.bf16.mxu0 0
    %408 = vmatpush1.bf16.msra.mxu0 %v328
    %409 = vmatprep.subr.bf16.mxu0 0
    %410 = vmatpush1.bf16.msra.mxu0 %v327
    %411 = vmatprep.subr.bf16.mxu0 0
    %412 = vmatpush1.bf16.msra.mxu0 %v326
    %413 = vmatprep.subr.bf16.mxu0 0
    %414 = vmatpush1.bf16.msra.mxu0 %v325
    %415 = vmatprep.subr.bf16.mxu0 0
    %416 = vmatpush1.bf16.msra.mxu0 %v324
    %417 = vmatprep.subr.bf16.mxu0 0
    %418 = vmatpush1.bf16.msra.mxu0 %v323
    %419 = vmatprep.subr.bf16.mxu0 0
    %420 = vmatpush2.bf16.msra.mxu0 %v338
    %421 = vmatprep.subr.bf16.mxu0 0
    %422 = vmatpush2.bf16.msra.mxu0 %v337
    %423 = vmatprep.subr.bf16.mxu0 0
    %424 = vmatpush2.bf16.msra.mxu0 %v336
    %425 = vmatprep.subr.bf16.mxu0 0
    %426 = vmatpush2.bf16.msra.mxu0 %v335
    %427 = vmatprep.subr.bf16.mxu0 0
    %428 = vmatpush2.bf16.msra.mxu0 %v334
    %429 = vmatprep.subr.bf16.mxu0 0
    %430 = vmatpush2.bf16.msra.mxu0 %v333
    %431 = vmatprep.subr.bf16.mxu0 0
    %432 = vmatpush2.bf16.msra.mxu0 %v332
    %433 = vmatprep.subr.bf16.mxu0 0
    %434 = vmatpush2.bf16.msra.mxu0 %v331
    %435 = vmatprep.mubr.bf16.mxu0 %v154
    %436 = vmatmul.mubr.bf16.gmra.mxu0 %v153
    %v437 = vpop.f32.mrf.mxu0
    %v438 = vadd.f32 %v135, %v437
    %v439 = vpop.f32.mrf.mxu0
    %v440 = vpop.f32.mrf.mxu0
    %v441 = vadd.f32 %v135, %v440
    %v442 = vpop.f32.mrf.mxu0
    %443 = vdwg.mxu0
    %444 = vmatprep.subr.bf16.mxu0 0
    %445 = vmatpush1.bf16.msra.mxu0 %v346
    %446 = vmatprep.subr.bf16.mxu0 0
    %447 = vmatpush1.bf16.msra.mxu0 %v345
    %448 = vmatprep.subr.bf16.mxu0 0
    %449 = vmatpush1.bf16.msra.mxu0 %v344
    %450 = vmatprep.subr.bf16.mxu0 0
    %451 = vmatpush1.bf16.msra.mxu0 %v343
    %452 = vmatprep.subr.bf16.mxu0 0
    %453 = vmatpush1.bf16.msra.mxu0 %v342
    %454 = vmatprep.subr.bf16.mxu0 0
    %455 = vmatpush1.bf16.msra.mxu0 %v341
    %456 = vmatprep.subr.bf16.mxu0 0
    %457 = vmatpush1.bf16.msra.mxu0 %v340
    %458 = vmatprep.subr.bf16.mxu0 0
    %459 = vmatpush1.bf16.msra.mxu0 %v339
    %460 = vmatprep.subr.bf16.mxu0 0
    %461 = vmatpush2.bf16.msra.mxu0 %v354
    %462 = vmatprep.subr.bf16.mxu0 0
    %463 = vmatpush2.bf16.msra.mxu0 %v353
    %464 = vmatprep.subr.bf16.mxu0 0
    %465 = vmatpush2.bf16.msra.mxu0 %v352
    %466 = vmatprep.subr.bf16.mxu0 0
    %467 = vmatpush2.bf16.msra.mxu0 %v351
    %468 = vmatprep.subr.bf16.mxu0 0
    %469 = vmatpush2.bf16.msra.mxu0 %v350
    %470 = vmatprep.subr.bf16.mxu0 0
    %471 = vmatpush2.bf16.msra.mxu0 %v349
    %472 = vmatprep.subr.bf16.mxu0 0
    %473 = vmatpush2.bf16.msra.mxu0 %v348
    %474 = vmatprep.subr.bf16.mxu0 0
    %475 = vmatpush2.bf16.msra.mxu0 %v347
    %476 = vmatprep.mubr.bf16.mxu0 %v156
    %477 = vmatmul.mubr.bf16.gmra.mxu0 %v155
    %v478 = vpop.f32.mrf.mxu0
    %v479 = vadd.f32 %v438, %v478
    %v480 = vpop.f32.mrf.mxu0
    %v481 = vpop.f32.mrf.mxu0
    %v482 = vadd.f32 %v441, %v481
    %v483 = vpop.f32.mrf.mxu0
    %484 = vdwg.mxu0
    %485 = vmatprep.subr.bf16.mxu0 0
    %486 = vmatpush1.bf16.msra.mxu0 %v362
    %487 = vmatprep.subr.bf16.mxu0 0
    %488 = vmatpush1.bf16.msra.mxu0 %v361
    %489 = vmatprep.subr.bf16.mxu0 0
    %490 = vmatpush1.bf16.msra.mxu0 %v360
    %491 = vmatprep.subr.bf16.mxu0 0
    %492 = vmatpush1.bf16.msra.mxu0 %v359
    %493 = vmatprep.subr.bf16.mxu0 0
    %494 = vmatpush1.bf16.msra.mxu0 %v358
    %495 = vmatprep.subr.bf16.mxu0 0
    %496 = vmatpush1.bf16.msra.mxu0 %v357
    %497 = vmatprep.subr.bf16.mxu0 0
    %498 = vmatpush1.bf16.msra.mxu0 %v356
    %499 = vmatprep.subr.bf16.mxu0 0
    %500 = vmatpush1.bf16.msra.mxu0 %v355
    %501 = vmatprep.subr.bf16.mxu0 0
    %502 = vmatpush2.bf16.msra.mxu0 0
    %503 = vmatprep.subr.bf16.mxu0 0
    %504 = vmatpush2.bf16.msra.mxu0 0
    %505 = vmatprep.subr.bf16.mxu0 0
    %506 = vmatpush2.bf16.msra.mxu0 0
    %507 = vmatprep.subr.bf16.mxu0 0
    %508 = vmatpush2.bf16.msra.mxu0 0
    %509 = vmatprep.subr.bf16.mxu0 0
    %510 = vmatpush2.bf16.msra.mxu0 0
    %511 = vmatprep.subr.bf16.mxu0 0
    %512 = vmatpush2.bf16.msra.mxu0 0
    %513 = vmatprep.subr.bf16.mxu0 0
    %514 = vmatpush2.bf16.msra.mxu0 0
    %515 = vmatprep.subr.bf16.mxu0 0
    %516 = vmatpush2.bf16.msra.mxu0 0
    %517 = vmatprep.mubr.bf16.mxu0 0
    %518 = vmatmul.mubr.bf16.gmra.mxu0 %v157
    %v519 = vpop.f32.mrf.mxu0
    %v520 = vadd.f32 %v479, %v519
    %v521 = vpop.f32.mrf.mxu0
    %v522 = vpop.f32.mrf.mxu0
    %v523 = vadd.f32 %v482, %v522
    %v524 = vpop.f32.mrf.mxu0
    %525 = vdwg.mxu0
    %526 = vst [vmem:[#allocation7] sm:$0xff] %v520
    %527 = vst [vmem:[#allocation7 + $0x8] sm:$0xff] %v523
    // Predicated region
    $region22: #{tpu_custom_call.1} parent=1 // pred_check
      _
    $region23: #{tpu_custom_call.1} parent=1 // pred_check_branch
      %529 = sbr.rel (0) target = $region25
    $region24: #{tpu_custom_call.1} parent=1 // pred_region
      %s531 = ssub.s32 256, 256
      %532 = vsyncadd [#allocation4], %s531
      %s533 = sshll.u32 [#allocation7], 4
      %s534 = int_to_ptr.vmem [resolvable:$true] %s533
      %539 = dma.vmem_to_hbm [thread:$0]  %s534, 256, %s3, [#allocation4], 128, 128, 8
    $region25: #{tpu_custom_call.1} parent=1 // pred_fallthru
      _
    // Predicated region
    $region26: #{tpu_custom_call.1} parent=1 // pred_check
      _
    $region27: #{tpu_custom_call.1} parent=1 // pred_check_branch
      %541 = sbr.rel (0) target = $region29
    $region28: #{tpu_custom_call.1} parent=1 // pred_region
      %542 = dma.done [#allocation4], 256
    $region29: #{tpu_custom_call.1} parent=1 // pred_fallthru
      _
    %543 = vsyncpa [#allocation3], 1
    %544 = vsyncpa [#allocation6], 1
    %545 = vsyncpa [#allocation4], 1

</llo_original>
